<compile_context>
chip_gen: v6e
topology: v6e:2x2x1
jax: 0.10.0
libtpu: 0.0.40
codegen_flags: <defaults>
</compile_context>

<pallas_src>
import functools

import jax
import jax.numpy as jnp
from jax.experimental import pallas as pl
from jax.experimental.pallas import tpu as pltpu  # noqa: F401  (TPU backend)


def fused_conv_add_kernel(x_ref, wb_ref, o_ref):
    """Fused (grouped 1x1 conv)(x1) + (grouped 1x1 conv)(x2) + bias.

    x_ref:  [N, 2*Cin, HW]   x1/x2 stacked on channels, NCHW flattened over H*W
    wb_ref: [Cout, 2*Cin+1]  [W1_blockdiag | W2_blockdiag | (b1+b2)]
    o_ref:  [N, Cout, HW]    lane-dense output (CHW order per sample)
    """
    n_batch, k2, hw = x_ref.shape
    cout = o_ref.shape[1]

    w = wb_ref[:, :k2]                                            # [Cout, 2*Cin]
    # Hoisted bias broadcast (JAX does not CSE broadcast_in_dim in loops).
    bias = jnp.broadcast_to(wb_ref[:, k2:k2 + 1], (cout, hw))     # [Cout, HW]

    # Static tiny loop over samples; each iteration is one short MXU matmul.
    for n in range(n_batch):
        acc = jnp.dot(w, x_ref[n], preferred_element_type=jnp.float32)
        o_ref[n] = acc + bias


@functools.partial(jax.jit, static_argnames=("groups", "padding"))
def fused_grouped_1x1_conv_add(x1, x2, w1, b1, w2, b2, *, groups, padding):
    """x1, x2: [N, Cin, H, W] f32. w: [Cout, Cin//groups, 1, 1]. Returns NCHW."""
    N, Cin, H, W = x1.shape
    Cout = w1.shape[0]
    # Border shortcut below is only valid for 1x1 kernels with stride 1.
    assert w1.shape[2:] == (1, 1) and w2.shape[2:] == (1, 1), "1x1 kernels only"
    Ig = Cin // groups
    Og = Cout // groups
    HW = H * W

    # Block-diagonal expansion of grouped weights via one gather + mask
    # (no per-group scatter loops).
    row_g = (jnp.arange(Cout) // Og)[:, None]          # [Cout, 1]
    col_g = (jnp.arange(Cin) // Ig)[None, :]           # [1, Cin]
    group_mask = row_g == col_g                        # [Cout, Cin]
    col_in_group = jnp.arange(Cin) % Ig

    def block_diag(w):
        w2d = w[:, :, 0, 0].astype(jnp.float32)        # [Cout, Cin//groups]
        full = jnp.take(w2d, col_in_group, axis=1)     # [Cout, Cin]
        return jnp.where(group_mask, full, 0.0)

    bsum = (b1 + b2).astype(jnp.float32)
    wb = jnp.concatenate(
        [block_diag(w1), block_diag(w2), bsum.reshape(Cout, 1)], axis=1)

    # Single input stream: stack x1/x2 on channels, reshape only (no pad,
    # no transpose). [N, 2*Cin, H*W]
    xcat = jnp.concatenate(
        [x1.reshape(N, Cin, HW), x2.reshape(N, Cin, HW)],
        axis=1).astype(jnp.float32)

    # One kernel invocation for the whole batch (grid=(1,)).
    interior = pl.pallas_call(
        fused_conv_add_kernel,
        out_shape=jax.ShapeDtypeStruct((N, Cout, HW), jnp.float32),
        grid=(1,),
        in_specs=[
            pl.BlockSpec((N, 2 * Cin, HW), lambda i: (0, 0, 0)),
            pl.BlockSpec((Cout, 2 * Cin + 1), lambda i: (0, 0)),
        ],
        out_specs=pl.BlockSpec((N, Cout, HW), lambda i: (0, 0, 0)),
    )(xcat, wb)

    interior = interior.reshape(N, Cout, H, W)
    if padding == 0:
        return interior

    # Border pixels of a padded 1x1/stride-1 conv see x = 0, so output there
    # is exactly b1 + b2: bias canvas + drop the interior in (fused by XLA
    # inside this jit).
    Hp, Wp = H + 2 * padding, W + 2 * padding
    canvas = jnp.broadcast_to(bsum.reshape(1, Cout, 1, 1), (N, Cout, Hp, Wp))
    return jax.lax.dynamic_update_slice(canvas, interior,
                                        (0, 0, padding, padding))


def _reference(x1, x2, w1, b1, w2, b2, *, groups, padding):
    dn = jax.lax.conv_dimension_numbers(x1.shape, w1.shape,
                                        ("NCHW", "OIHW", "NCHW"))

    def conv(x, w, b):
        y = jax.lax.conv_general_dilated(
            x, w, window_strides=(1, 1),
            padding=[(padding, padding), (padding, padding)],
            dimension_numbers=dn, feature_group_count=groups)
        return y + b.reshape(1, -1, 1, 1)

    return conv(x1, w1, b1) + conv(x2, w2, b2)


if __name__ == "__main__":
    # Small shapes consistent with the module's forward (grouped 1x1 conv + add).
    N, Cin, H, W = 2, 4, 16, 16
    Cout, groups, padding = 8, 2, 1

    key = jax.random.PRNGKey(0)
    k1, k2, k3, k4, k5, k6 = jax.random.split(key, 6)

    x1 = jax.random.normal(k1, (N, Cin, H, W), dtype=jnp.float32)
    x2 = jax.random.normal(k2, (N, Cin, H, W), dtype=jnp.float32)

    # Deterministic params (shapes follow nn.Conv2d(Cin, 8, 1, groups=2)).
    w1 = 0.1 * jax.random.normal(k3, (Cout, Cin // groups, 1, 1), dtype=jnp.float32)
    b1 = 0.1 * jax.random.normal(k4, (Cout,), dtype=jnp.float32)
    w2 = 0.1 * jax.random.normal(k5, (Cout, Cin // groups, 1, 1), dtype=jnp.float32)
    b2 = 0.1 * jax.random.normal(k6, (Cout,), dtype=jnp.float32)

    out = fused_grouped_1x1_conv_add(x1, x2, w1, b1, w2, b2,
                                     groups=groups, padding=padding)
    out = jax.block_until_ready(out)

    ref = _reference(x1, x2, w1, b1, w2, b2, groups=groups, padding=padding)
    assert out.shape == (N, Cout, H + 2 * padding, W + 2 * padding), out.shape
    assert jnp.allclose(out, ref, atol=1e-5, rtol=1e-5), "mismatch vs reference"

    print("KERNEL_OK")
</pallas_src>

<mosaic_0001>
module attributes {stable_mosaic.version = 11 : i64} {
  func.func @fused_conv_add_kernel(%arg0: i32, %arg1: memref<2x8x256xf32, #tpu.memory_space<vmem>>, %arg2: memref<8x9xf32, #tpu.memory_space<vmem>>, %arg3: memref<2x8x256xf32, #tpu.memory_space<vmem>>) attributes {dimension_semantics = [#tpu.dimension_semantics<arbitrary>], iteration_bounds = array<i64: 1>, scalar_prefetch = 0 : i64, scratch_operands = 0 : i64, tpu.core_type = #tpu.core_type<tc>, window_params = [{pipeline_mode = #tpu.pipeline_mode<synchronous>, transform_indices = @transform_0, window_bounds = array<i64: 2, 8, 256>}, {pipeline_mode = #tpu.pipeline_mode<synchronous>, transform_indices = @transform_1, window_bounds = array<i64: 8, 9>}, {pipeline_mode = #tpu.pipeline_mode<synchronous>, transform_indices = @transform_2, window_bounds = array<i64: 2, 8, 256>}]} {
    %c0 = arith.constant 0 : index
    %c0_0 = arith.constant 0 : index
    %0 = vector.load %arg2[%c0, %c0_0] : memref<8x9xf32, #tpu.memory_space<vmem>>, vector<8x8xf32>
    %c0_1 = arith.constant 0 : index
    %c8 = arith.constant 8 : index
    %1 = vector.load %arg2[%c0_1, %c8] : memref<8x9xf32, #tpu.memory_space<vmem>>, vector<8x1xf32>
    %2 = vector.shape_cast %1 : vector<8x1xf32> to vector<8x1xf32>
    %3 = vector.broadcast %2 : vector<8x1xf32> to vector<8x256xf32>
    %c0_2 = arith.constant 0 : index
    %c0_3 = arith.constant 0 : index
    %c0_4 = arith.constant 0 : index
    %4 = vector.load %arg1[%c0_2, %c0_3, %c0_4] : memref<2x8x256xf32, #tpu.memory_space<vmem>>, vector<1x8x256xf32>
    %5 = vector.shape_cast %4 : vector<1x8x256xf32> to vector<8x256xf32>
    %cst = arith.constant dense<0.000000e+00> : vector<8x256xf32>
    %6 = tpu.matmul %0, %5, %cst {dimension_numbers = #tpu.dot_dimension_numbers<[1], [0], [0], [1], [0, 0, 1, 1], [], []>} : vector<8x8xf32>, vector<8x256xf32>, vector<8x256xf32> -> vector<8x256xf32>
    %7 = arith.addf %6, %3 : vector<8x256xf32>
    %c0_5 = arith.constant 0 : index
    %c0_6 = arith.constant 0 : index
    %c0_7 = arith.constant 0 : index
    %8 = vector.load %arg3[%c0_5, %c0_6, %c0_7] : memref<2x8x256xf32, #tpu.memory_space<vmem>>, vector<1x8x256xf32>
    %9 = vector.shape_cast %8 : vector<1x8x256xf32> to vector<8x256xf32>
    %10 = vector.shape_cast %7 : vector<8x256xf32> to vector<1x8x256xf32>
    tpu.vector_store %arg3[%c0_5, %c0_6, %c0_7], %10 {strides = array<i32>} : memref<2x8x256xf32, #tpu.memory_space<vmem>>, vector<1x8x256xf32>,
    %c1 = arith.constant 1 : index
    %c0_8 = arith.constant 0 : index
    %c0_9 = arith.constant 0 : index
    %11 = vector.load %arg1[%c1, %c0_8, %c0_9] : memref<2x8x256xf32, #tpu.memory_space<vmem>>, vector<1x8x256xf32>
    %12 = vector.shape_cast %11 : vector<1x8x256xf32> to vector<8x256xf32>
    %cst_10 = arith.constant dense<0.000000e+00> : vector<8x256xf32>
    %13 = tpu.matmul %0, %12, %cst_10 {dimension_numbers = #tpu.dot_dimension_numbers<[1], [0], [0], [1], [0, 0, 1, 1], [], []>} : vector<8x8xf32>, vector<8x256xf32>, vector<8x256xf32> -> vector<8x256xf32>
    %14 = arith.addf %13, %3 : vector<8x256xf32>
    %c1_11 = arith.constant 1 : index
    %c0_12 = arith.constant 0 : index
    %c0_13 = arith.constant 0 : index
    %15 = vector.load %arg3[%c1_11, %c0_12, %c0_13] : memref<2x8x256xf32, #tpu.memory_space<vmem>>, vector<1x8x256xf32>
    %16 = vector.shape_cast %15 : vector<1x8x256xf32> to vector<8x256xf32>
    %17 = vector.shape_cast %14 : vector<8x256xf32> to vector<1x8x256xf32>
    tpu.vector_store %arg3[%c1_11, %c0_12, %c0_13], %17 {strides = array<i32>} : memref<2x8x256xf32, #tpu.memory_space<vmem>>, vector<1x8x256xf32>,
    return
  }
  func.func @transform_0(%arg0: i32) -> (i32, i32, i32) {
    %c0_i32 = arith.constant 0 : i32
    %c0_i32_0 = arith.constant 0 : i32
    %c0_i32_1 = arith.constant 0 : i32
    %c0_i32_2 = arith.constant 0 : i32
    return %c0_i32, %c0_i32_0, %c0_i32_1 : i32, i32, i32
  }
  func.func @transform_1(%arg0: i32) -> (i32, i32) {
    %c0_i32 = arith.constant 0 : i32
    %c0_i32_0 = arith.constant 0 : i32
    %c0_i32_1 = arith.constant 0 : i32
    return %c0_i32, %c0_i32_0 : i32, i32
  }
  func.func @transform_2(%arg0: i32) -> (i32, i32, i32) {
    %c0_i32 = arith.constant 0 : i32
    %c0_i32_0 = arith.constant 0 : i32
    %c0_i32_1 = arith.constant 0 : i32
    %c0_i32_2 = arith.constant 0 : i32
    return %c0_i32, %c0_i32_0, %c0_i32_1 : i32, i32, i32
  }
}

</mosaic_0001>

<llo_original>
// kernel: fused_grouped_1x1_conv_add.1
$region0: #{fused_grouped_1x1_conv_add.1}
  #allocation0 [shape = 'u32[]', space=smem, size = 0x4, offset = 0x4, fixed_abs, tag = 'smem constant byte address 0x4 - core index']
  #allocation1 [shape = 'u32[144,128]{1,0:T(1,128)}', space=vmem, size = 0x12000, scoped, tag = 'internal scratch']
  %s0 = inlined_call_operand.vmem [shape: f32[2,8,256], index: 0, kind: input, shape index: {}]
  %s1 = inlined_call_operand.vmem [shape: f32[8,9], index: 1, kind: input, shape index: {}]
  %s2 = inlined_call_operand.vmem [shape: f32[2,8,256], index: 2, kind: output, shape index: {}]
  %s3 = sld [smem:[#allocation0]]
  $region18: #{fused_grouped_1x1_conv_add.1} parent=0
    _
  %s5 = ssub.s32 1, %s3
  %s6 = scalar_select 0, %s5, %s3
  // Predicated region
  $region2: #{fused_grouped_1x1_conv_add.1} parent=0 // pred_check
    _
  $region3: #{fused_grouped_1x1_conv_add.1} parent=0 // pred_check_branch
    %8 = sbr.rel (0) target = $region5
  $region4: #{fused_grouped_1x1_conv_add.1} parent=0 // pred_region
    _
  $region5: #{fused_grouped_1x1_conv_add.1} parent=0 // pred_fallthru
    _
  // Predicated region
  $region6: #{fused_grouped_1x1_conv_add.1} parent=0 // pred_check
    _
  $region7: #{fused_grouped_1x1_conv_add.1} parent=0 // pred_check_branch
    %10 = sbr.rel (0) target = $region9
  $region8: #{fused_grouped_1x1_conv_add.1} parent=0 // pred_region
    _
  $region9: #{fused_grouped_1x1_conv_add.1} parent=0 // pred_fallthru
    _
  %v11 = vld [vmem:[%s1] sm:$0xff]
  %13 = vset.pattern.permute.xlu0 8
  %14 = vperm.xlu0 %13, %v11
  %v15 = vpop.permute.xlu0 %14
  %v17 = vld [vmem:[%s0] sm:$0xff]
  %v18 = vld [vmem:[%s0 + $0x8] sm:$0xff]
  %vm19 = vcmask 64512
  %v20 = vsel %vm19, %v11, 0
  %22 = vmatprep.subr.mxu0 0.0
  %23 = vmatpush1.msra.mxu0 0.0
  %24 = vmatprep.subr.mxu0 0.0
  %25 = vmatpush1.msra.mxu0 0.0
  %26 = vmatprep.subr.mxu0 0.0
  %27 = vmatpush1.msra.mxu0 0.0
  %28 = vmatprep.subr.mxu0 0.0
  %29 = vmatpush1.msra.mxu0 0.0
  %30 = vmatprep.subr.mxu0 0.0
  %31 = vmatpush1.msra.mxu0 0.0
  %32 = vmatprep.subr.mxu0 0.0
  %33 = vmatpush1.msra.mxu0 0.0
  %34 = vmatprep.subr.mxu0 0.0
  %35 = vmatpush1.msra.mxu0 0.0
  %36 = vmatprep.subr.mxu0 0.0
  %37 = vmatpush1.msra.mxu0 0.0
  %38 = vmatprep.subr.mxu0 0.0
  %39 = vmatpush1.msra.mxu0 0.0
  %40 = vmatprep.subr.mxu0 0.0
  %41 = vmatpush1.msra.mxu0 0.0
  %42 = vmatprep.subr.mxu0 0.0
  %43 = vmatpush1.msra.mxu0 0.0
  %44 = vmatprep.subr.mxu0 0.0
  %45 = vmatpush1.msra.mxu0 0.0
  %46 = vmatprep.subr.mxu0 0.0
  %47 = vmatpush1.msra.mxu0 0.0
  %48 = vmatprep.subr.mxu0 0.0
  %49 = vmatpush1.msra.mxu0 0.0
  %50 = vmatprep.subr.mxu0 0.0
  %51 = vmatpush1.msra.mxu0 0.0
  %52 = vmatprep.subr.mxu0 %v18
  %53 = vmatpush1.msra.mxu0 %v17
  %54 = vmatprep.subr.mxu0 0.0
  %55 = vmatpush2.msra.mxu0 0.0
  %56 = vmatprep.subr.mxu0 0.0
  %57 = vmatpush2.msra.mxu0 0.0
  %58 = vmatprep.subr.mxu0 0.0
  %59 = vmatpush2.msra.mxu0 0.0
  %60 = vmatprep.subr.mxu0 0.0
  %61 = vmatpush2.msra.mxu0 0.0
  %62 = vmatprep.subr.mxu0 0.0
  %63 = vmatpush2.msra.mxu0 0.0
  %64 = vmatprep.subr.mxu0 0.0
  %65 = vmatpush2.msra.mxu0 0.0
  %66 = vmatprep.subr.mxu0 0.0
  %67 = vmatpush2.msra.mxu0 0.0
  %68 = vmatprep.subr.mxu0 0.0
  %69 = vmatpush2.msra.mxu0 0.0
  %70 = vmatprep.subr.mxu0 0.0
  %71 = vmatpush2.msra.mxu0 0.0
  %72 = vmatprep.subr.mxu0 0.0
  %73 = vmatpush2.msra.mxu0 0.0
  %74 = vmatprep.subr.mxu0 0.0
  %75 = vmatpush2.msra.mxu0 0.0
  %76 = vmatprep.subr.mxu0 0.0
  %77 = vmatpush2.msra.mxu0 0.0
  %78 = vmatprep.subr.mxu0 0.0
  %79 = vmatpush2.msra.mxu0 0.0
  %80 = vmatprep.subr.mxu0 0.0
  %81 = vmatpush2.msra.mxu0 0.0
  %82 = vmatprep.subr.mxu0 0.0
  %83 = vmatpush2.msra.mxu0 0.0
  %84 = vmatprep.subr.mxu0 0.0
  %85 = vmatpush2.msra.mxu0 0.0
  %86 = vmatprep.mubr.f32.mxu0 0.0
  %87 = vmatmul.mubr.f32.gmra.mxu0 %v20
  %v88 = vpop.f32.mrf.mxu0
  %v89 = vadd.f32 %v15, %v88
  %v90 = vpop.f32.mrf.mxu0
  %v91 = vadd.f32 %v15, %v90
  %92 = vdwg.mxu0
  %93 = vst [vmem:[%s2] sm:$0xff] %v89
  %94 = vst [vmem:[%s2 + $0x8] sm:$0xff] %v91
  %s95 = scalar_lea.vmem %s0, 16
  %v96 = vld [vmem:[%s95] sm:$0xff]
  %v97 = vld [vmem:[%s95 + $0x8] sm:$0xff]
  %98 = vmatprep.subr.mxu0 0.0
  %99 = vmatpush1.msra.mxu0 0.0
  %100 = vmatprep.subr.mxu0 0.0
  %101 = vmatpush1.msra.mxu0 0.0
  %102 = vmatprep.subr.mxu0 0.0
  %103 = vmatpush1.msra.mxu0 0.0
  %104 = vmatprep.subr.mxu0 0.0
  %105 = vmatpush1.msra.mxu0 0.0
  %106 = vmatprep.subr.mxu0 0.0
  %107 = vmatpush1.msra.mxu0 0.0
  %108 = vmatprep.subr.mxu0 0.0
  %109 = vmatpush1.msra.mxu0 0.0
  %110 = vmatprep.subr.mxu0 0.0
  %111 = vmatpush1.msra.mxu0 0.0
  %112 = vmatprep.subr.mxu0 0.0
  %113 = vmatpush1.msra.mxu0 0.0
  %114 = vmatprep.subr.mxu0 0.0
  %115 = vmatpush1.msra.mxu0 0.0
  %116 = vmatprep.subr.mxu0 0.0
  %117 = vmatpush1.msra.mxu0 0.0
  %118 = vmatprep.subr.mxu0 0.0
  %119 = vmatpush1.msra.mxu0 0.0
  %120 = vmatprep.subr.mxu0 0.0
  %121 = vmatpush1.msra.mxu0 0.0
  %122 = vmatprep.subr.mxu0 0.0
  %123 = vmatpush1.msra.mxu0 0.0
  %124 = vmatprep.subr.mxu0 0.0
  %125 = vmatpush1.msra.mxu0 0.0
  %126 = vmatprep.subr.mxu0 0.0
  %127 = vmatpush1.msra.mxu0 0.0
  %128 = vmatprep.subr.mxu0 %v97
  %129 = vmatpush1.msra.mxu0 %v96
  %130 = vmatprep.subr.mxu0 0.0
  %131 = vmatpush2.msra.mxu0 0.0
  %132 = vmatprep.subr.mxu0 0.0
  %133 = vmatpush2.msra.mxu0 0.0
  %134 = vmatprep.subr.mxu0 0.0
  %135 = vmatpush2.msra.mxu0 0.0
  %136 = vmatprep.subr.mxu0 0.0
  %137 = vmatpush2.msra.mxu0 0.0
  %138 = vmatprep.subr.mxu0 0.0
  %139 = vmatpush2.msra.mxu0 0.0
  %140 = vmatprep.subr.mxu0 0.0
  %141 = vmatpush2.msra.mxu0 0.0
  %142 = vmatprep.subr.mxu0 0.0
  %143 = vmatpush2.msra.mxu0 0.0
  %144 = vmatprep.subr.mxu0 0.0
  %145 = vmatpush2.msra.mxu0 0.0
  %146 = vmatprep.subr.mxu0 0.0
  %147 = vmatpush2.msra.mxu0 0.0
  %148 = vmatprep.subr.mxu0 0.0
  %149 = vmatpush2.msra.mxu0 0.0
  %150 = vmatprep.subr.mxu0 0.0
  %151 = vmatpush2.msra.mxu0 0.0
  %152 = vmatprep.subr.mxu0 0.0
  %153 = vmatpush2.msra.mxu0 0.0
  %154 = vmatprep.subr.mxu0 0.0
  %155 = vmatpush2.msra.mxu0 0.0
  %156 = vmatprep.subr.mxu0 0.0
  %157 = vmatpush2.msra.mxu0 0.0
  %158 = vmatprep.subr.mxu0 0.0
  %159 = vmatpush2.msra.mxu0 0.0
  %160 = vmatprep.subr.mxu0 0.0
  %161 = vmatpush2.msra.mxu0 0.0
  %162 = vmatprep.mubr.f32.mxu0 0.0
  %163 = vmatmul.mubr.f32.gmra.mxu0 %v20
  %v164 = vpop.f32.mrf.mxu0
  %v165 = vadd.f32 %v15, %v164
  %v166 = vpop.f32.mrf.mxu0
  %v167 = vadd.f32 %v15, %v166
  %168 = vdwg.mxu0
  %s169 = scalar_lea.vmem %s2, 16
  %170 = vst [vmem:[%s169] sm:$0xff] %v165
  %171 = vst [vmem:[%s169 + $0x8] sm:$0xff] %v167
  // Predicated region
  $region10: #{fused_grouped_1x1_conv_add.1} parent=0 // pred_check
    _
  $region11: #{fused_grouped_1x1_conv_add.1} parent=0 // pred_check_branch
    %173 = sbr.rel (0) target = $region13
  $region12: #{fused_grouped_1x1_conv_add.1} parent=0 // pred_region
    _
  $region13: #{fused_grouped_1x1_conv_add.1} parent=0 // pred_fallthru
    _
  // Predicated region
  $region14: #{fused_grouped_1x1_conv_add.1} parent=0 // pred_check
    _
  $region15: #{fused_grouped_1x1_conv_add.1} parent=0 // pred_check_branch
    %175 = sbr.rel (0) target = $region17
  $region16: #{fused_grouped_1x1_conv_add.1} parent=0 // pred_region
    _
  $region17: #{fused_grouped_1x1_conv_add.1} parent=0 // pred_fallthru
    _

</llo_original>
